<compile_context>
chip_gen: v5e
topology: v5e:2x2
jax: 0.10.0
libtpu: 0.0.40
codegen_flags: <defaults>
</compile_context>

<pallas_src>
import jax
import jax.numpy as jnp
from jax import lax
from jax.experimental import pallas as pl
from jax.experimental.pallas import tpu as pltpu

# -------------------- model dims (mirror the PyTorch __init__) --------------------
IN_FEATS = 8          # input_features
H1 = 32               # feat_map1: Linear(input_features, 32)
EMB = 16              # reg_emb / dep_emb dim
CAT = H1 + 2 * EMB    # 64, input to conv1
C1 = 16               # conv1: SAGEConv(64, 16)
C2 = 32               # conv2: SAGEConv(16, 32)
OUT = 1               # lin: Linear(32, 1)
NUM_REG = 22
NUM_DEP = 96

LANES = 128           # lane width of weight slab / padded output
OH = 128              # combined one-hot width (22 reg lanes + 96 dep lanes = 118 <= 128)

# ---- bf16 weight-slab row layout (every segment starts on a 16-row bf16 tile boundary) ----
R_WX = 0                        # [8, 64]    w1 in cols 0:32
R_WEMB = 16                     # [128, 64]  reg_emb rows 0:22 @ cols 32:48, dep_emb rows 22:118 @ cols 48:64
R_WL1 = R_WEMB + OH             # 144: [64, 16]  conv1 lin_l
R_WR1 = R_WL1 + CAT             # 208: [64, 16]  conv1 lin_r
R_WL2 = R_WR1 + CAT             # 272: [16, 32]  conv2 lin_l
R_WR2 = R_WL2 + 16              # 288: [16, 32]  conv2 lin_r
R_WLIN = R_WR2 + 16             # 304: [32, 128] head weight, zero-padded on lanes
SLAB_ROWS = R_WLIN + C2         # 336

# ---- f32 bias-slab rows ----
B_B1, B_BL1, B_BL2, B_BLIN = 0, 1, 2, 3
BIAS_ROWS = 8


def gcn_kernel(x_ref, reg_ref, dep_ref, adj_ref, w_ref, b_ref, out_ref):
    n = x_ref.shape[0]
    x = x_ref[...].astype(jnp.bfloat16)                      # [N, 8]
    adj = adj_ref[...]                                       # [N, N] bf16

    # Combined one-hot selector for both embedding tables (pure iota + compare, no gather).
    lane = lax.broadcasted_iota(jnp.int32, (n, OH), 1)       # [N, 128]
    reg_id = reg_ref[...]                                    # [N, 1] int32
    dep_id = dep_ref[...]                                    # [N, 1] int32
    oh = ((lane == reg_id) | (lane == dep_id + NUM_REG)).astype(jnp.bfloat16)

    # feat_map1 + both embedding lookups + concat: two independent bf16 dots, summed in f32.
    h = (jnp.dot(x, w_ref[R_WX:R_WX + IN_FEATS, 0:CAT],
                 preferred_element_type=jnp.float32)
         + jnp.dot(oh, w_ref[R_WEMB:R_WEMB + OH, 0:CAT],
                   preferred_element_type=jnp.float32)
         + b_ref[B_B1:B_B1 + 1, 0:CAT])                      # [N, 64] f32
    h_bf = h.astype(jnp.bfloat16)

    # conv1: SAGEConv(64, 16), mean aggregation.  adj@h and h@wr1 are independent MXU pushes.
    agg1 = jnp.dot(adj, h_bf, preferred_element_type=jnp.float32)            # [N, 64]
    h1 = (jnp.dot(agg1.astype(jnp.bfloat16), w_ref[R_WL1:R_WL1 + CAT, 0:C1],
                  preferred_element_type=jnp.float32)
          + jnp.dot(h_bf, w_ref[R_WR1:R_WR1 + CAT, 0:C1],
                    preferred_element_type=jnp.float32)
          + b_ref[B_BL1:B_BL1 + 1, 0:C1])
    h1_bf = jnp.maximum(h1, 0.0).astype(jnp.bfloat16)        # [N, 16]

    # conv2: SAGEConv(16, 32), mean aggregation.
    agg2 = jnp.dot(adj, h1_bf, preferred_element_type=jnp.float32)           # [N, 16]
    h2 = (jnp.dot(agg2.astype(jnp.bfloat16), w_ref[R_WL2:R_WL2 + C1, 0:C2],
                  preferred_element_type=jnp.float32)
          + jnp.dot(h1_bf, w_ref[R_WR2:R_WR2 + C1, 0:C2],
                    preferred_element_type=jnp.float32)
          + b_ref[B_BL2:B_BL2 + 1, 0:C2])
    h2_bf = jnp.maximum(h2, 0.0).astype(jnp.bfloat16)        # [N, 32]

    # Regression head, emitted lane-dense as [N, 128] (real result lives in lane 0).
    out_ref[...] = (jnp.dot(h2_bf, w_ref[R_WLIN:R_WLIN + C2, :],
                            preferred_element_type=jnp.float32)
                    + b_ref[B_BLIN:B_BLIN + 1, :])


def _full_spec(shape):
    zeros = (0,) * len(shape)
    return pl.BlockSpec(shape, lambda i: zeros)


def pack_weight_slab(p):
    """Pack every matmul weight (incl. both embedding tables) into one bf16 [336,128] slab."""
    slab = jnp.zeros((SLAB_ROWS, LANES), jnp.float32)
    slab = slab.at[R_WX:R_WX + IN_FEATS, 0:H1].set(p["w1"])
    slab = slab.at[R_WEMB:R_WEMB + NUM_REG, H1:H1 + EMB].set(p["reg_emb"])
    slab = slab.at[R_WEMB + NUM_REG:R_WEMB + NUM_REG + NUM_DEP, H1 + EMB:CAT].set(p["dep_emb"])
    slab = slab.at[R_WL1:R_WL1 + CAT, 0:C1].set(p["wl1"])
    slab = slab.at[R_WR1:R_WR1 + CAT, 0:C1].set(p["wr1"])
    slab = slab.at[R_WL2:R_WL2 + C1, 0:C2].set(p["wl2"])
    slab = slab.at[R_WR2:R_WR2 + C1, 0:C2].set(p["wr2"])
    slab = slab.at[R_WLIN:R_WLIN + C2, 0:OUT].set(p["wlin"])
    return slab.astype(jnp.bfloat16)


def pack_bias_slab(p):
    """Biases stay f32 and are added after the f32 accumulate."""
    b = jnp.zeros((BIAS_ROWS, LANES), jnp.float32)
    b = b.at[B_B1, 0:H1].set(p["b1"][0])
    b = b.at[B_BL1, 0:C1].set(p["bl1"][0])
    b = b.at[B_BL2, 0:C2].set(p["bl2"][0])
    b = b.at[B_BLIN, 0:OUT].set(p["blin"][0])
    return b


def build_mean_adj(edge_index, n):
    """Row-normalized mean-aggregation matrix (built once per graph and cached, bf16).
    edge_index[0] = src j, edge_index[1] = dst i;  A[i, j] = multiplicity / in_deg(i)."""
    src, dst = edge_index[0], edge_index[1]
    e = src.shape[0]
    ones_e = jnp.ones((e,), jnp.float32)
    counts = jax.ops.segment_sum(ones_e, dst * n + src, num_segments=n * n).reshape(n, n)
    deg = jax.ops.segment_sum(ones_e, dst, num_segments=n)
    return (counts / jnp.maximum(deg, 1.0)[:, None]).astype(jnp.bfloat16)


def gcn_forward(x, reg_ids2, dep_ids2, adj, w_slab, bias_slab):
    """One Pallas call; all glue (adj, id reshape, weight packing) is precomputed/cached."""
    n = x.shape[0]
    flops = 2 * n * (IN_FEATS * CAT + OH * CAT + n * CAT + 2 * CAT * C1
                     + n * C1 + 2 * C1 * C2 + C2 * LANES)
    bytes_accessed = (4 * n * IN_FEATS + 4 * n * 2 + 2 * n * n
                      + 2 * SLAB_ROWS * LANES + 4 * BIAS_ROWS * LANES + 4 * n * LANES)

    out_pad = pl.pallas_call(
        gcn_kernel,
        grid=(1,),
        in_specs=[_full_spec(x.shape),
                  _full_spec(reg_ids2.shape),
                  _full_spec(dep_ids2.shape),
                  _full_spec(adj.shape),
                  _full_spec(w_slab.shape),
                  _full_spec(bias_slab.shape)],
        out_specs=_full_spec((n, LANES)),
        out_shape=jax.ShapeDtypeStruct((n, LANES), jnp.float32),
        compiler_params=pltpu.CompilerParams(
            dimension_semantics=("parallel",)),
        cost_estimate=pl.CostEstimate(flops=flops, transcendentals=0,
                                      bytes_accessed=bytes_accessed),
    )(x, reg_ids2, dep_ids2, adj, w_slab, bias_slab)

    return out_pad[:, :OUT]                                   # [N, 1]


def init_params(key):
    """Deterministic synthetic parameters. Linear weights stored (in, out)
    (already transposed vs. PyTorch's (out, in)); biases as (1, out)."""
    ks = jax.random.split(key, 12)
    s = 0.1
    return {
        "w1":   jax.random.normal(ks[0], (IN_FEATS, H1), jnp.float32) * s,
        "b1":   jax.random.normal(ks[1], (1, H1), jnp.float32) * s,
        "reg_emb": jax.random.normal(ks[2], (NUM_REG, EMB), jnp.float32) * s,
        "dep_emb": jax.random.normal(ks[3], (NUM_DEP, EMB), jnp.float32) * s,
        # SAGEConv1: lin_l (aggregated neighbors, has bias), lin_r (root, no bias)
        "wl1":  jax.random.normal(ks[4], (CAT, C1), jnp.float32) * s,
        "bl1":  jax.random.normal(ks[5], (1, C1), jnp.float32) * s,
        "wr1":  jax.random.normal(ks[6], (CAT, C1), jnp.float32) * s,
        # SAGEConv2
        "wl2":  jax.random.normal(ks[7], (C1, C2), jnp.float32) * s,
        "bl2":  jax.random.normal(ks[8], (1, C2), jnp.float32) * s,
        "wr2":  jax.random.normal(ks[9], (C1, C2), jnp.float32) * s,
        # head
        "wlin": jax.random.normal(ks[10], (C2, OUT), jnp.float32) * s,
        "blin": jax.random.normal(ks[11], (1, OUT), jnp.float32) * s,
    }


def gcn_reference(x, reg_ids, dep_ids, edge_index, p):
    """Pure-JAX f32 reference matching the PyTorch forward (for a tolerance check)."""
    n = x.shape[0]
    h0 = x @ p["w1"] + p["b1"]
    h = jnp.concatenate([h0, p["reg_emb"][reg_ids], p["dep_emb"][dep_ids]], axis=1)
    src, dst = edge_index[0], edge_index[1]
    ones_e = jnp.ones((src.shape[0],), jnp.float32)
    counts = jax.ops.segment_sum(ones_e, dst * n + src, num_segments=n * n).reshape(n, n)
    deg = jax.ops.segment_sum(ones_e, dst, num_segments=n)
    adj = counts / jnp.maximum(deg, 1.0)[:, None]
    h1 = jax.nn.relu(adj @ h @ p["wl1"] + h @ p["wr1"] + p["bl1"])
    h2 = jax.nn.relu(adj @ h1 @ p["wl2"] + h1 @ p["wr2"] + p["bl2"])
    return h2 @ p["wlin"] + p["blin"]


if __name__ == "__main__":
    key = jax.random.PRNGKey(0)
    k_x, k_reg, k_dep, k_p = jax.random.split(key, 4)

    N = 64  # number of graph nodes
    x = jax.random.normal(k_x, (N, IN_FEATS), jnp.float32)
    reg_ids = jax.random.randint(k_reg, (N,), 0, NUM_REG)
    dep_ids = jax.random.randint(k_dep, (N,), 0, NUM_DEP)

    # simple bidirectional ring graph: i -> i+1 and i -> i-1 (mod N)
    idx = jnp.arange(N)
    src = jnp.concatenate([idx, idx])
    dst = jnp.concatenate([(idx + 1) % N, (idx - 1) % N])
    edge_index = jnp.stack([src, dst], axis=0)   # [2, E]

    params = init_params(k_p)

    # Per-model / per-graph constants: packed / built ONCE and reused across forward calls.
    w_slab = pack_weight_slab(params)            # bf16 [336, 128]
    bias_slab = pack_bias_slab(params)           # f32  [8, 128]
    adj = build_mean_adj(edge_index, N)          # bf16 [N, N]
    reg_ids2 = reg_ids[:, None].astype(jnp.int32)   # [N, 1]
    dep_ids2 = dep_ids[:, None].astype(jnp.int32)   # [N, 1]

    fwd = jax.jit(gcn_forward)
    out = fwd(x, reg_ids2, dep_ids2, adj, w_slab, bias_slab)
    out = jax.block_until_ready(out)
    assert out.shape == (N, OUT), out.shape

    # Tolerance check vs. f32 reference (bf16 matmul path -> loose abs tolerance).
    ref = gcn_reference(x, reg_ids, dep_ids, edge_index, params)
    max_err = float(jnp.max(jnp.abs(out - ref)))
    assert max_err < 3e-2, f"max abs error vs f32 reference too large: {max_err}"

    print("KERNEL_OK")
</pallas_src>

<mosaic_0001>
module attributes {stable_mosaic.version = 11 : i64} {
  func.func @gcn_kernel(%arg0: i32, %arg1: memref<64x8xf32, #tpu.memory_space<vmem>>, %arg2: memref<64x1xi32, #tpu.memory_space<vmem>>, %arg3: memref<64x1xi32, #tpu.memory_space<vmem>>, %arg4: memref<64x64xbf16, #tpu.memory_space<vmem>>, %arg5: memref<336x128xbf16, #tpu.memory_space<vmem>>, %arg6: memref<8x128xf32, #tpu.memory_space<vmem>>, %arg7: memref<64x128xf32, #tpu.memory_space<vmem>>) attributes {dimension_semantics = [#tpu.dimension_semantics<parallel>], iteration_bounds = array<i64: 1>, scalar_prefetch = 0 : i64, scratch_operands = 0 : i64, tpu.core_type = #tpu.core_type<tc>, window_params = [{pipeline_mode = #tpu.pipeline_mode<synchronous>, transform_indices = @transform_0, window_bounds = array<i64: 64, 8>}, {pipeline_mode = #tpu.pipeline_mode<synchronous>, transform_indices = @transform_1, window_bounds = array<i64: 64, 1>}, {pipeline_mode = #tpu.pipeline_mode<synchronous>, transform_indices = @transform_2, window_bounds = array<i64: 64, 1>}, {pipeline_mode = #tpu.pipeline_mode<synchronous>, transform_indices = @transform_3, window_bounds = array<i64: 64, 64>}, {pipeline_mode = #tpu.pipeline_mode<synchronous>, transform_indices = @transform_4, window_bounds = array<i64: 336, 128>}, {pipeline_mode = #tpu.pipeline_mode<synchronous>, transform_indices = @transform_5, window_bounds = array<i64: 8, 128>}, {pipeline_mode = #tpu.pipeline_mode<synchronous>, transform_indices = @transform_6, window_bounds = array<i64: 64, 128>}]} {
    %c0 = arith.constant 0 : index
    %c0_0 = arith.constant 0 : index
    %0 = vector.load %arg1[%c0, %c0_0] : memref<64x8xf32, #tpu.memory_space<vmem>>, vector<64x8xf32>
    %1 = arith.truncf %0 : vector<64x8xf32> to vector<64x8xbf16>
    %c0_1 = arith.constant 0 : index
    %c0_2 = arith.constant 0 : index
    %2 = vector.load %arg4[%c0_1, %c0_2] : memref<64x64xbf16, #tpu.memory_space<vmem>>, vector<64x64xbf16>
    %3 = tpu.iota {dimensions = array<i32: 1>} : vector<64x128xi32>
    %c0_3 = arith.constant 0 : index
    %c0_4 = arith.constant 0 : index
    %4 = vector.load %arg2[%c0_3, %c0_4] : memref<64x1xi32, #tpu.memory_space<vmem>>, vector<64x1xi32>
    %c0_5 = arith.constant 0 : index
    %c0_6 = arith.constant 0 : index
    %5 = vector.load %arg3[%c0_5, %c0_6] : memref<64x1xi32, #tpu.memory_space<vmem>>, vector<64x1xi32>
    %6 = vector.broadcast %4 : vector<64x1xi32> to vector<64x128xi32>
    %7 = arith.cmpi eq, %3, %6 : vector<64x128xi32>
    %c22_i32 = arith.constant 22 : i32
    %8 = vector.broadcast %c22_i32 : i32 to vector<64x1xi32>
    %9 = arith.addi %5, %8 : vector<64x1xi32>
    %10 = vector.broadcast %9 : vector<64x1xi32> to vector<64x128xi32>
    %11 = arith.cmpi eq, %3, %10 : vector<64x128xi32>
    %12 = arith.ori %7, %11 : vector<64x128xi1>
    %13 = arith.extui %12 : vector<64x128xi1> to vector<64x128xi32>
    %14 = arith.sitofp %13 : vector<64x128xi32> to vector<64x128xf32>
    %15 = arith.truncf %14 : vector<64x128xf32> to vector<64x128xbf16>
    %c0_7 = arith.constant 0 : index
    %c0_8 = arith.constant 0 : index
    %16 = vector.load %arg5[%c0_7, %c0_8] : memref<336x128xbf16, #tpu.memory_space<vmem>>, vector<8x64xbf16>
    %cst = arith.constant dense<0.000000e+00> : vector<64x64xf32>
    %17 = tpu.matmul %1, %16, %cst {dimension_numbers = #tpu.dot_dimension_numbers<[1], [0], [0], [1], [0, 0, 1, 1], [], []>} : vector<64x8xbf16>, vector<8x64xbf16>, vector<64x64xf32> -> vector<64x64xf32>
    %c16 = arith.constant 16 : index
    %c0_9 = arith.constant 0 : index
    %18 = vector.load %arg5[%c16, %c0_9] : memref<336x128xbf16, #tpu.memory_space<vmem>>, vector<128x64xbf16>
    %cst_10 = arith.constant dense<0.000000e+00> : vector<64x64xf32>
    %19 = tpu.matmul %15, %18, %cst_10 {dimension_numbers = #tpu.dot_dimension_numbers<[1], [0], [0], [1], [0, 0, 1, 1], [], []>} : vector<64x128xbf16>, vector<128x64xbf16>, vector<64x64xf32> -> vector<64x64xf32>
    %20 = arith.addf %17, %19 : vector<64x64xf32>
    %c0_11 = arith.constant 0 : index
    %c0_12 = arith.constant 0 : index
    %21 = vector.load %arg6[%c0_11, %c0_12] : memref<8x128xf32, #tpu.memory_space<vmem>>, vector<1x64xf32>
    %22 = vector.broadcast %21 : vector<1x64xf32> to vector<64x64xf32>
    %23 = arith.addf %20, %22 : vector<64x64xf32>
    %24 = arith.truncf %23 : vector<64x64xf32> to vector<64x64xbf16>
    %cst_13 = arith.constant dense<0.000000e+00> : vector<64x64xf32>
    %25 = tpu.matmul %2, %24, %cst_13 {dimension_numbers = #tpu.dot_dimension_numbers<[1], [0], [0], [1], [0, 0, 1, 1], [], []>} : vector<64x64xbf16>, vector<64x64xbf16>, vector<64x64xf32> -> vector<64x64xf32>
    %26 = arith.truncf %25 : vector<64x64xf32> to vector<64x64xbf16>
    %c144 = arith.constant 144 : index
    %c0_14 = arith.constant 0 : index
    %27 = vector.load %arg5[%c144, %c0_14] : memref<336x128xbf16, #tpu.memory_space<vmem>>, vector<64x16xbf16>
    %cst_15 = arith.constant dense<0.000000e+00> : vector<64x16xf32>
    %28 = tpu.matmul %26, %27, %cst_15 {dimension_numbers = #tpu.dot_dimension_numbers<[1], [0], [0], [1], [0, 0, 1, 1], [], []>} : vector<64x64xbf16>, vector<64x16xbf16>, vector<64x16xf32> -> vector<64x16xf32>
    %c208 = arith.constant 208 : index
    %c0_16 = arith.constant 0 : index
    %29 = vector.load %arg5[%c208, %c0_16] : memref<336x128xbf16, #tpu.memory_space<vmem>>, vector<64x16xbf16>
    %cst_17 = arith.constant dense<0.000000e+00> : vector<64x16xf32>
    %30 = tpu.matmul %24, %29, %cst_17 {dimension_numbers = #tpu.dot_dimension_numbers<[1], [0], [0], [1], [0, 0, 1, 1], [], []>} : vector<64x64xbf16>, vector<64x16xbf16>, vector<64x16xf32> -> vector<64x16xf32>
    %31 = arith.addf %28, %30 : vector<64x16xf32>
    %c1 = arith.constant 1 : index
    %c0_18 = arith.constant 0 : index
    %32 = vector.load %arg6[%c1, %c0_18] : memref<8x128xf32, #tpu.memory_space<vmem>>, vector<1x16xf32>
    %33 = vector.broadcast %32 : vector<1x16xf32> to vector<64x16xf32>
    %34 = arith.addf %31, %33 : vector<64x16xf32>
    %cst_19 = arith.constant 0.000000e+00 : f32
    %35 = vector.broadcast %cst_19 : f32 to vector<64x16xf32>
    %36 = arith.maximumf %34, %35 : vector<64x16xf32>
    %37 = arith.truncf %36 : vector<64x16xf32> to vector<64x16xbf16>
    %cst_20 = arith.constant dense<0.000000e+00> : vector<64x16xf32>
    %38 = tpu.matmul %2, %37, %cst_20 {dimension_numbers = #tpu.dot_dimension_numbers<[1], [0], [0], [1], [0, 0, 1, 1], [], []>} : vector<64x64xbf16>, vector<64x16xbf16>, vector<64x16xf32> -> vector<64x16xf32>
    %39 = arith.truncf %38 : vector<64x16xf32> to vector<64x16xbf16>
    %c272 = arith.constant 272 : index
    %c0_21 = arith.constant 0 : index
    %40 = vector.load %arg5[%c272, %c0_21] : memref<336x128xbf16, #tpu.memory_space<vmem>>, vector<16x32xbf16>
    %cst_22 = arith.constant dense<0.000000e+00> : vector<64x32xf32>
    %41 = tpu.matmul %39, %40, %cst_22 {dimension_numbers = #tpu.dot_dimension_numbers<[1], [0], [0], [1], [0, 0, 1, 1], [], []>} : vector<64x16xbf16>, vector<16x32xbf16>, vector<64x32xf32> -> vector<64x32xf32>
    %c288 = arith.constant 288 : index
    %c0_23 = arith.constant 0 : index
    %42 = vector.load %arg5[%c288, %c0_23] : memref<336x128xbf16, #tpu.memory_space<vmem>>, vector<16x32xbf16>
    %cst_24 = arith.constant dense<0.000000e+00> : vector<64x32xf32>
    %43 = tpu.matmul %37, %42, %cst_24 {dimension_numbers = #tpu.dot_dimension_numbers<[1], [0], [0], [1], [0, 0, 1, 1], [], []>} : vector<64x16xbf16>, vector<16x32xbf16>, vector<64x32xf32> -> vector<64x32xf32>
    %44 = arith.addf %41, %43 : vector<64x32xf32>
    %c2 = arith.constant 2 : index
    %c0_25 = arith.constant 0 : index
    %45 = vector.load %arg6[%c2, %c0_25] : memref<8x128xf32, #tpu.memory_space<vmem>>, vector<1x32xf32>
    %46 = vector.broadcast %45 : vector<1x32xf32> to vector<64x32xf32>
    %47 = arith.addf %44, %46 : vector<64x32xf32>
    %cst_26 = arith.constant 0.000000e+00 : f32
    %48 = vector.broadcast %cst_26 : f32 to vector<64x32xf32>
    %49 = arith.maximumf %47, %48 : vector<64x32xf32>
    %50 = arith.truncf %49 : vector<64x32xf32> to vector<64x32xbf16>
    %c304 = arith.constant 304 : index
    %c0_27 = arith.constant 0 : index
    %51 = vector.load %arg5[%c304, %c0_27] : memref<336x128xbf16, #tpu.memory_space<vmem>>, vector<32x128xbf16>
    %cst_28 = arith.constant dense<0.000000e+00> : vector<64x128xf32>
    %52 = tpu.matmul %50, %51, %cst_28 {dimension_numbers = #tpu.dot_dimension_numbers<[1], [0], [0], [1], [0, 0, 1, 1], [], []>} : vector<64x32xbf16>, vector<32x128xbf16>, vector<64x128xf32> -> vector<64x128xf32>
    %c3 = arith.constant 3 : index
    %c0_29 = arith.constant 0 : index
    %53 = vector.load %arg6[%c3, %c0_29] : memref<8x128xf32, #tpu.memory_space<vmem>>, vector<1x128xf32>
    %54 = vector.broadcast %53 : vector<1x128xf32> to vector<64x128xf32>
    %55 = arith.addf %52, %54 : vector<64x128xf32>
    %c0_30 = arith.constant 0 : index
    %c0_31 = arith.constant 0 : index
    %56 = vector.load %arg7[%c0_30, %c0_31] : memref<64x128xf32, #tpu.memory_space<vmem>>, vector<64x128xf32>
    tpu.vector_store %arg7[%c0_30, %c0_31], %55 {strides = array<i32>} : memref<64x128xf32, #tpu.memory_space<vmem>>, vector<64x128xf32>,
    return
  }
  func.func @transform_0(%arg0: i32) -> (i32, i32) {
    %c0_i32 = arith.constant 0 : i32
    %c0_i32_0 = arith.constant 0 : i32
    %c0_i32_1 = arith.constant 0 : i32
    return %c0_i32, %c0_i32_0 : i32, i32
  }
  func.func @transform_1(%arg0: i32) -> (i32, i32) {
    %c0_i32 = arith.constant 0 : i32
    %c0_i32_0 = arith.constant 0 : i32
    %c0_i32_1 = arith.constant 0 : i32
    return %c0_i32, %c0_i32_0 : i32, i32
  }
  func.func @transform_2(%arg0: i32) -> (i32, i32) {
    %c0_i32 = arith.constant 0 : i32
    %c0_i32_0 = arith.constant 0 : i32
    %c0_i32_1 = arith.constant 0 : i32
    return %c0_i32, %c0_i32_0 : i32, i32
  }
  func.func @transform_3(%arg0: i32) -> (i32, i32) {
    %c0_i32 = arith.constant 0 : i32
    %c0_i32_0 = arith.constant 0 : i32
    %c0_i32_1 = arith.constant 0 : i32
    return %c0_i32, %c0_i32_0 : i32, i32
  }
  func.func @transform_4(%arg0: i32) -> (i32, i32) {
    %c0_i32 = arith.constant 0 : i32
    %c0_i32_0 = arith.constant 0 : i32
    %c0_i32_1 = arith.constant 0 : i32
    return %c0_i32, %c0_i32_0 : i32, i32
  }
  func.func @transform_5(%arg0: i32) -> (i32, i32) {
    %c0_i32 = arith.constant 0 : i32
    %c0_i32_0 = arith.constant 0 : i32
    %c0_i32_1 = arith.constant 0 : i32
    return %c0_i32, %c0_i32_0 : i32, i32
  }
  func.func @transform_6(%arg0: i32) -> (i32, i32) {
    %c0_i32 = arith.constant 0 : i32
    %c0_i32_0 = arith.constant 0 : i32
    %c0_i32_1 = arith.constant 0 : i32
    return %c0_i32, %c0_i32_0 : i32, i32
  }
}

</mosaic_0001>

<llo_original>
// kernel: gcn_forward.1
$region0: #{gcn_forward.1}
  #allocation0 [shape = 'u32[]', space=smem, size = 0x4, offset = 0x4, fixed_abs, tag = 'smem constant byte address 0x4 - core index']
  #allocation1 [shape = 'u32[72,128]{1,0:T(1,128)}', space=vmem, size = 0x9000, scoped, tag = 'internal scratch']
  %s0 = inlined_call_operand.vmem [shape: f32[64,8], index: 0, kind: input, shape index: {}]
  %s1 = inlined_call_operand.vmem [shape: s32[64,1], index: 1, kind: input, shape index: {}]
  %s2 = inlined_call_operand.vmem [shape: s32[64,1], index: 2, kind: input, shape index: {}]
  %s3 = inlined_call_operand.vmem [shape: bf16[64,64], index: 3, kind: input, shape index: {}]
  %s4 = inlined_call_operand.vmem [shape: bf16[336,128], index: 4, kind: input, shape index: {}]
  %s5 = inlined_call_operand.hbm [shape: f32[8,128], index: 5, kind: input, shape index: {}]
  %s6 = inlined_call_operand.vmem [shape: f32[64,128], index: 6, kind: output, shape index: {}]
  %s7 = sld [smem:[#allocation0]]
  $region38: #{gcn_forward.1} parent=0
    _
  %s9 = ssub.s32 1, %s7
  %s10 = scalar_select 0, %s9, %s7
  $region1: #{gcn_forward.1} parent=0
    #allocation2 [shape = 'u8[4096]{0}', space=vmem, size = 0x1000, scoped, tag = 'input window, operand 5, single buffered']
    #allocation3 [shape = 's32[1]{0}', space=sflag, size = 0x4, scoped, tag = 'scoped memory for gcn_forward.1']
    %11 = vsyncpa [#allocation3], 0
    // Predicated region
    $region2: #{gcn_forward.1} parent=1 // pred_check
      _
    $region3: #{gcn_forward.1} parent=1 // pred_check_branch
      %13 = sbr.rel (0) target = $region5
    $region4: #{gcn_forward.1} parent=1 // pred_region
      _
    $region5: #{gcn_forward.1} parent=1 // pred_fallthru
      _
    // Predicated region
    $region6: #{gcn_forward.1} parent=1 // pred_check
      _
    $region7: #{gcn_forward.1} parent=1 // pred_check_branch
      %15 = sbr.rel (0) target = $region9
    $region8: #{gcn_forward.1} parent=1 // pred_region
      _
    $region9: #{gcn_forward.1} parent=1 // pred_fallthru
      _
    // Predicated region
    $region10: #{gcn_forward.1} parent=1 // pred_check
      _
    $region11: #{gcn_forward.1} parent=1 // pred_check_branch
      %17 = sbr.rel (0) target = $region13
    $region12: #{gcn_forward.1} parent=1 // pred_region
      _
    $region13: #{gcn_forward.1} parent=1 // pred_fallthru
      _
    // Predicated region
    $region14: #{gcn_forward.1} parent=1 // pred_check
      _
    $region15: #{gcn_forward.1} parent=1 // pred_check_branch
      %19 = sbr.rel (0) target = $region17
    $region16: #{gcn_forward.1} parent=1 // pred_region
      _
    $region17: #{gcn_forward.1} parent=1 // pred_fallthru
      _
    // Predicated region
    $region18: #{gcn_forward.1} parent=1 // pred_check
      _
    $region19: #{gcn_forward.1} parent=1 // pred_check_branch
      %21 = sbr.rel (0) target = $region21
    $region20: #{gcn_forward.1} parent=1 // pred_region
      _
    $region21: #{gcn_forward.1} parent=1 // pred_fallthru
      _
    // Predicated region
    $region22: #{gcn_forward.1} parent=1 // pred_check
      _
    $region23: #{gcn_forward.1} parent=1 // pred_check_branch
      %23 = sbr.rel (0) target = $region25
    $region24: #{gcn_forward.1} parent=1 // pred_region
      %25 = vsyncadd [#allocation3], 0
      %s27 = sshll.u32 %s5, 4
      %s28 = int_to_ptr.hbm [resolvable:$true] %s27
      %s29 = sshll.u32 [#allocation2], 4
      %s30 = int_to_ptr.vmem [resolvable:$true] %s29
      %32 = dma.hbm_to_vmem [thread:$0]  %s28, 128, %s30, [#allocation3]
    $region25: #{gcn_forward.1} parent=1 // pred_fallthru
      _
    // Predicated region
    $region26: #{gcn_forward.1} parent=1 // pred_check
      _
    $region27: #{gcn_forward.1} parent=1 // pred_check_branch
      %34 = sbr.rel (0) target = $region29
    $region28: #{gcn_forward.1} parent=1 // pred_region
      %36 = dma.done [#allocation3], 128
    $region29: #{gcn_forward.1} parent=1 // pred_fallthru
      _
    %v38 = vld [vmem:[%s0] sm:$0xff]
    %v39 = vld [vmem:[%s0 + $0x8] sm:$0xff]
    %v40 = vld [vmem:[%s0 + $0x10] sm:$0xff]
    %v41 = vld [vmem:[%s0 + $0x18] sm:$0xff]
    %v42 = vld [vmem:[%s0 + $0x20] sm:$0xff]
    %v43 = vld [vmem:[%s0 + $0x28] sm:$0xff]
    %v44 = vld [vmem:[%s0 + $0x30] sm:$0xff]
    %v45 = vld [vmem:[%s0 + $0x38] sm:$0xff]
    %v46 = vpack.c.bf16 %v39, %v38
    %v47 = vpack.c.bf16 %v41, %v40
    %v48 = vpack.c.bf16 %v43, %v42
    %v49 = vpack.c.bf16 %v45, %v44
    %v50 = vld [vmem:[%s3] sm:$0xf]
    %v51 = vld [vmem:[%s3 + $0x4] sm:$0xf]
    %v52 = vld [vmem:[%s3 + $0x8] sm:$0xf]
    %v53 = vld [vmem:[%s3 + $0xc] sm:$0xf]
    %v54 = vld [vmem:[%s3 + $0x10] sm:$0xf]
    %v55 = vld [vmem:[%s3 + $0x14] sm:$0xf]
    %v56 = vld [vmem:[%s3 + $0x18] sm:$0xf]
    %v57 = vld [vmem:[%s3 + $0x1c] sm:$0xf]
    %v58 = vlaneseq
    %v59 = vand.u32 %v58, 127
    %v60 = vld [vmem:[%s1] sm:$0xff]
    %v61 = vld [vmem:[%s1 + $0x8] sm:$0xff]
    %v62 = vld [vmem:[%s1 + $0x10] sm:$0xff]
    %v63 = vld [vmem:[%s1 + $0x18] sm:$0xff]
    %v64 = vld [vmem:[%s1 + $0x20] sm:$0xff]
    %v65 = vld [vmem:[%s1 + $0x28] sm:$0xff]
    %v66 = vld [vmem:[%s1 + $0x30] sm:$0xff]
    %v67 = vld [vmem:[%s1 + $0x38] sm:$0xff]
    %v68 = vld [vmem:[%s2] sm:$0xff]
    %v69 = vld [vmem:[%s2 + $0x8] sm:$0xff]
    %v70 = vld [vmem:[%s2 + $0x10] sm:$0xff]
    %v71 = vld [vmem:[%s2 + $0x18] sm:$0xff]
    %v72 = vld [vmem:[%s2 + $0x20] sm:$0xff]
    %v73 = vld [vmem:[%s2 + $0x28] sm:$0xff]
    %v74 = vld [vmem:[%s2 + $0x30] sm:$0xff]
    %v75 = vld [vmem:[%s2 + $0x38] sm:$0xff]
    %76 = vset.pattern.permute.xlu0 0
    %77 = vperm.xlu0 %76, %v60
    %v78 = vpop.permute.xlu0 %77
    %79 = vset.pattern.permute.xlu0 0
    %80 = vperm.xlu0 %79, %v61
    %v81 = vpop.permute.xlu0 %80
    %82 = vset.pattern.permute.xlu0 0
    %83 = vperm.xlu0 %82, %v62
    %v84 = vpop.permute.xlu0 %83
    %85 = vset.pattern.permute.xlu0 0
    %86 = vperm.xlu0 %85, %v63
    %v87 = vpop.permute.xlu0 %86
    %88 = vset.pattern.permute.xlu0 0
    %89 = vperm.xlu0 %88, %v64
    %v90 = vpop.permute.xlu0 %89
    %91 = vset.pattern.permute.xlu0 0
    %92 = vperm.xlu0 %91, %v65
    %v93 = vpop.permute.xlu0 %92
    %94 = vset.pattern.permute.xlu0 0
    %95 = vperm.xlu0 %94, %v66
    %v96 = vpop.permute.xlu0 %95
    %97 = vset.pattern.permute.xlu0 0
    %98 = vperm.xlu0 %97, %v67
    %v99 = vpop.permute.xlu0 %98
    %vm100 = vcmp.eq.s32.totalorder %v59, %v78
    %vm101 = vcmp.eq.s32.totalorder %v59, %v81
    %vm102 = vcmp.eq.s32.totalorder %v59, %v84
    %vm103 = vcmp.eq.s32.totalorder %v59, %v87
    %vm104 = vcmp.eq.s32.totalorder %v59, %v90
    %vm105 = vcmp.eq.s32.totalorder %v59, %v93
    %vm106 = vcmp.eq.s32.totalorder %v59, %v96
    %vm107 = vcmp.eq.s32.totalorder %v59, %v99
    %v108 = vadd.s32 %v68, 22
    %v109 = vadd.s32 %v69, 22
    %v110 = vadd.s32 %v70, 22
    %v111 = vadd.s32 %v71, 22
    %v112 = vadd.s32 %v72, 22
    %v113 = vadd.s32 %v73, 22
    %v114 = vadd.s32 %v74, 22
    %v115 = vadd.s32 %v75, 22
    %116 = vset.pattern.permute.xlu0 0
    %117 = vperm.xlu0 %116, %v108
    %v118 = vpop.permute.xlu0 %117
    %119 = vset.pattern.permute.xlu0 0
    %120 = vperm.xlu0 %119, %v109
    %v121 = vpop.permute.xlu0 %120
    %122 = vset.pattern.permute.xlu0 0
    %123 = vperm.xlu0 %122, %v110
    %v124 = vpop.permute.xlu0 %123
    %125 = vset.pattern.permute.xlu0 0
    %126 = vperm.xlu0 %125, %v111
    %v127 = vpop.permute.xlu0 %126
    %128 = vset.pattern.permute.xlu0 0
    %129 = vperm.xlu0 %128, %v112
    %v130 = vpop.permute.xlu0 %129
    %131 = vset.pattern.permute.xlu0 0
    %132 = vperm.xlu0 %131, %v113
    %v133 = vpop.permute.xlu0 %132
    %134 = vset.pattern.permute.xlu0 0
    %135 = vperm.xlu0 %134, %v114
    %v136 = vpop.permute.xlu0 %135
    %137 = vset.pattern.permute.xlu0 0
    %138 = vperm.xlu0 %137, %v115
    %v139 = vpop.permute.xlu0 %138
    %vm140 = vcmp.eq.s32.totalorder %v59, %v118
    %vm141 = vcmp.eq.s32.totalorder %v59, %v121
    %vm142 = vcmp.eq.s32.totalorder %v59, %v124
    %vm143 = vcmp.eq.s32.totalorder %v59, %v127
    %vm144 = vcmp.eq.s32.totalorder %v59, %v130
    %vm145 = vcmp.eq.s32.totalorder %v59, %v133
    %vm146 = vcmp.eq.s32.totalorder %v59, %v136
    %vm147 = vcmp.eq.s32.totalorder %v59, %v139
    %vm148 = vmor %vm100, %vm140
    %vm149 = vmor %vm101, %vm141
    %vm150 = vmor %vm102, %vm142
    %vm151 = vmor %vm103, %vm143
    %vm152 = vmor %vm104, %vm144
    %vm153 = vmor %vm105, %vm145
    %vm154 = vmor %vm106, %vm146
    %vm155 = vmor %vm107, %vm147
    %v156 = vsel %vm148, 1, 0
    %v157 = vsel %vm149, 1, 0
    %v158 = vsel %vm150, 1, 0
    %v159 = vsel %vm151, 1, 0
    %v160 = vsel %vm152, 1, 0
    %v161 = vsel %vm153, 1, 0
    %v162 = vsel %vm154, 1, 0
    %v163 = vsel %vm155, 1, 0
    %v164 = vcvt.s32.f32 %v156
    %v165 = vcvt.s32.f32 %v157
    %v166 = vcvt.s32.f32 %v158
    %v167 = vcvt.s32.f32 %v159
    %v168 = vcvt.s32.f32 %v160
    %v169 = vcvt.s32.f32 %v161
    %v170 = vcvt.s32.f32 %v162
    %v171 = vcvt.s32.f32 %v163
    %v172 = vpack.c.bf16 %v165, %v164
    %v173 = vpack.c.bf16 %v167, %v166
    %v174 = vpack.c.bf16 %v169, %v168
    %v175 = vpack.c.bf16 %v171, %v170
    %v176 = vld [vmem:[%s4] sm:$0xf]
    %v177 = vld [vmem:[%s4 + $0x8] sm:$0xf]
    %v178 = vld [vmem:[%s4 + $0xc] sm:$0xf]
    %v179 = vld [vmem:[%s4 + $0x10] sm:$0xf]
    %v180 = vld [vmem:[%s4 + $0x14] sm:$0xf]
    %v181 = vld [vmem:[%s4 + $0x18] sm:$0xf]
    %v182 = vld [vmem:[%s4 + $0x1c] sm:$0xf]
    %v183 = vld [vmem:[%s4 + $0x20] sm:$0xf]
    %v184 = vld [vmem:[%s4 + $0x24] sm:$0xf]
    %v185 = vld [vmem:[%s4 + $0x28] sm:$0xf]
    %v186 = vld [vmem:[%s4 + $0x2c] sm:$0xf]
    %v187 = vld [vmem:[%s4 + $0x30] sm:$0xf]
    %v188 = vld [vmem:[%s4 + $0x34] sm:$0xf]
    %v189 = vld [vmem:[%s4 + $0x38] sm:$0xf]
    %v190 = vld [vmem:[%s4 + $0x3c] sm:$0xf]
    %v191 = vld [vmem:[%s4 + $0x40] sm:$0xf]
    %v192 = vld [vmem:[%s4 + $0x44] sm:$0xf]
    %v209 = vunpack.c.l.b16 %v177
    %v210 = vunpack.c.l.b16 %v178
    %v211 = vunpack.c.l.b16 %v179
    %v212 = vunpack.c.l.b16 %v180
    %v213 = vunpack.c.l.b16 %v181
    %v214 = vunpack.c.l.b16 %v182
    %v215 = vunpack.c.l.b16 %v183
    %v216 = vunpack.c.l.b16 %v184
    %v217 = vunpack.c.l.b16 %v185
    %v218 = vunpack.c.l.b16 %v186
    %v219 = vunpack.c.l.b16 %v187
    %v220 = vunpack.c.l.b16 %v188
    %v221 = vunpack.c.l.b16 %v189
    %v222 = vunpack.c.l.b16 %v190
    %v223 = vunpack.c.l.b16 %v191
    %v224 = vunpack.c.l.b16 %v192
    %v225 = vpack.c.b16 %v210, %v209
    %v226 = vpack.c.b16 %v212, %v211
    %v227 = vpack.c.b16 %v214, %v213
    %v228 = vpack.c.b16 %v216, %v215
    %v229 = vpack.c.b16 %v218, %v217
    %v230 = vpack.c.b16 %v220, %v219
    %v231 = vpack.c.b16 %v222, %v221
    %v232 = vpack.c.b16 %v224, %v223
    %241 = vmatpush.bf16.msra.mxu0 %v232
    %242 = vmatpush.bf16.msra.mxu0 %v231
    %243 = vmatpush.bf16.msra.mxu0 %v230
    %244 = vmatpush.bf16.msra.mxu0 %v229
    %245 = vmatpush.bf16.msra.mxu0 %v228
    %246 = vmatpush.bf16.msra.mxu0 %v227
    %247 = vmatpush.bf16.msra.mxu0 %v226
    %248 = vmatpush.bf16.msra.mxu0 %v225
    %249 = vmatmul.bf16.gmra.mxu0 %v172
    %v250 = vpop.f32.mrf.mxu0
    %v251 = vadd.f32 0.0, %v250
    %v252 = vpop.f32.mrf.mxu0
    %v253 = vadd.f32 0.0, %v252
    %254 = vmatmul.bf16.gmra.mxu0 %v173
    %v255 = vpop.f32.mrf.mxu0
    %v256 = vadd.f32 0.0, %v255
    %v257 = vpop.f32.mrf.mxu0
    %v258 = vadd.f32 0.0, %v257
    %259 = vmatmul.bf16.gmra.mxu0 %v174
    %v260 = vpop.f32.mrf.mxu0
    %v261 = vadd.f32 0.0, %v260
    %v262 = vpop.f32.mrf.mxu0
    %v263 = vadd.f32 0.0, %v262
    %264 = vmatmul.bf16.gmra.mxu0 %v175
    %v265 = vpop.f32.mrf.mxu0
    %v266 = vadd.f32 0.0, %v265
    %v267 = vpop.f32.mrf.mxu0
    %v268 = vadd.f32 0.0, %v267
    %269 = vdwg.mxu0
    %vm270 = vcmask 64512
    %v272 = vsel %vm270, %v46, 0
    %v275 = vsel %vm270, %v47, 0
    %v278 = vsel %vm270, %v48, 0
    %v281 = vsel %vm270, %v49, 0
    %vm283 = vcmask 1043456
    %v285 = vsel %vm283, %v176, 0
    %287 = vmatpush.bf16.msra.mxu0 0
    %288 = vmatpush.bf16.msra.mxu0 0
    %289 = vmatpush.bf16.msra.mxu0 0
    %290 = vmatpush.bf16.msra.mxu0 0
    %291 = vmatpush.bf16.msra.mxu0 0
    %292 = vmatpush.bf16.msra.mxu0 0
    %293 = vmatpush.bf16.msra.mxu0 0
    %294 = vmatpush.bf16.msra.mxu0 %v285
    %295 = vmatmul.bf16.gmra.mxu0 %v272
    %v296 = vpop.f32.mrf.mxu0
    %v297 = vadd.f32 %v251, %v296
    %v298 = vpop.f32.mrf.mxu0
    %v299 = vadd.f32 %v253, %v298
    %300 = vmatmul.bf16.gmra.mxu0 %v275
    %v301 = vpop.f32.mrf.mxu0
    %v302 = vadd.f32 %v256, %v301
    %v303 = vpop.f32.mrf.mxu0
    %v304 = vadd.f32 %v258, %v303
    %305 = vmatmul.bf16.gmra.mxu0 %v278
    %v306 = vpop.f32.mrf.mxu0
    %v307 = vadd.f32 %v261, %v306
    %v308 = vpop.f32.mrf.mxu0
    %v309 = vadd.f32 %v263, %v308
    %310 = vmatmul.bf16.gmra.mxu0 %v281
    %v311 = vpop.f32.mrf.mxu0
    %v312 = vadd.f32 %v266, %v311
    %v313 = vpop.f32.mrf.mxu0
    %v314 = vadd.f32 %v268, %v313
    %315 = vdwg.mxu0
    %v316 = vld [vmem:[#allocation2] sm:$0x1]
    %v317 = vperm.slane %v316, 0
    %v318 = vadd.f32 %v297, %v317
    %v319 = vadd.f32 %v299, %v317
    %v320 = vadd.f32 %v302, %v317
    %v321 = vadd.f32 %v304, %v317
    %v322 = vadd.f32 %v307, %v317
    %v323 = vadd.f32 %v309, %v317
    %v324 = vadd.f32 %v312, %v317
    %v325 = vadd.f32 %v314, %v317
    %v326 = vpack.c.bf16 %v319, %v318
    %v327 = vpack.c.bf16 %v321, %v320
    %v328 = vpack.c.bf16 %v323, %v322
    %v329 = vpack.c.bf16 %v325, %v324
    %v338 = vunpack.c.l.b16 %v50
    %v339 = vunpack.c.l.b16 %v51
    %v340 = vunpack.c.l.b16 %v52
    %v341 = vunpack.c.l.b16 %v53
    %v342 = vunpack.c.l.b16 %v54
    %v343 = vunpack.c.l.b16 %v55
    %v344 = vunpack.c.l.b16 %v56
    %v345 = vunpack.c.l.b16 %v57
    %v346 = vpack.c.b16 %v339, %v338
    %v347 = vpack.c.b16 %v341, %v340
    %v348 = vpack.c.b16 %v343, %v342
    %v349 = vpack.c.b16 %v345, %v344
    %vm350 = vcmask 523264
    %v352 = vsel %vm350, %v346, 0
    %v355 = vsel %vm350, %v347, 0
    %v358 = vsel %vm350, %v348, 0
    %v361 = vsel %vm350, %v349, 0
    %363 = vmatpush.bf16.msra.mxu0 0
    %364 = vmatpush.bf16.msra.mxu0 0
    %365 = vmatpush.bf16.msra.mxu0 0
    %366 = vmatpush.bf16.msra.mxu0 0
    %367 = vmatpush.bf16.msra.mxu0 %v329
    %368 = vmatpush.bf16.msra.mxu0 %v328
    %369 = vmatpush.bf16.msra.mxu0 %v327
    %370 = vmatpush.bf16.msra.mxu0 %v326
    %371 = vmatmul.bf16.gmra.mxu0 %v352
    %v372 = vpop.f32.mrf.mxu0
    %v373 = vadd.f32 0.0, %v372
    %v374 = vpop.f32.mrf.mxu0
    %v375 = vadd.f32 0.0, %v374
    %376 = vmatmul.bf16.gmra.mxu0 %v355
    %v377 = vpop.f32.mrf.mxu0
    %v378 = vadd.f32 0.0, %v377
    %v379 = vpop.f32.mrf.mxu0
    %v380 = vadd.f32 0.0, %v379
    %381 = vmatmul.bf16.gmra.mxu0 %v358
    %v382 = vpop.f32.mrf.mxu0
    %v383 = vadd.f32 0.0, %v382
    %v384 = vpop.f32.mrf.mxu0
    %v385 = vadd.f32 0.0, %v384
    %386 = vmatmul.bf16.gmra.mxu0 %v361
    %v387 = vpop.f32.mrf.mxu0
    %v388 = vadd.f32 0.0, %v387
    %v389 = vpop.f32.mrf.mxu0
    %v390 = vadd.f32 0.0, %v389
    %391 = vdwg.mxu0
    %v392 = vpack.c.bf16 %v375, %v373
    %v393 = vpack.c.bf16 %v380, %v378
    %v394 = vpack.c.bf16 %v385, %v383
    %v395 = vpack.c.bf16 %v390, %v388
    %v396 = vld [vmem:[%s4 + $0x48] sm:$0xf]
    %v397 = vld [vmem:[%s4 + $0x4c] sm:$0xf]
    %v398 = vld [vmem:[%s4 + $0x50] sm:$0xf]
    %v399 = vld [vmem:[%s4 + $0x54] sm:$0xf]
    %v400 = vld [vmem:[%s4 + $0x58] sm:$0xf]
    %v401 = vld [vmem:[%s4 + $0x5c] sm:$0xf]
    %v402 = vld [vmem:[%s4 + $0x60] sm:$0xf]
    %v403 = vld [vmem:[%s4 + $0x64] sm:$0xf]
    %v404 = vld [vmem:[%s4 + $0x68] sm:$0xf]
    %v405 = vld [vmem:[%s4 + $0x6c] sm:$0xf]
    %v406 = vld [vmem:[%s4 + $0x70] sm:$0xf]
    %v407 = vld [vmem:[%s4 + $0x74] sm:$0xf]
    %v408 = vld [vmem:[%s4 + $0x78] sm:$0xf]
    %v409 = vld [vmem:[%s4 + $0x7c] sm:$0xf]
    %v410 = vld [vmem:[%s4 + $0x80] sm:$0xf]
    %v411 = vld [vmem:[%s4 + $0x84] sm:$0xf]
    %v420 = vunpack.c.l.b16 %v404
    %v421 = vunpack.c.l.b16 %v405
    %v422 = vunpack.c.l.b16 %v406
    %v423 = vunpack.c.l.b16 %v407
    %v424 = vunpack.c.l.b16 %v408
    %v425 = vunpack.c.l.b16 %v409
    %v426 = vunpack.c.l.b16 %v410
    %v427 = vunpack.c.l.b16 %v411
    %v428 = vpack.c.b16 %v421, %v420
    %v429 = vpack.c.b16 %v423, %v422
    %v430 = vpack.c.b16 %v425, %v424
    %v431 = vpack.c.b16 %v427, %v426
    %v437 = vsel %vm350, %v326, 0
    %v440 = vsel %vm350, %v327, 0
    %v443 = vsel %vm350, %v328, 0
    %v446 = vsel %vm350, %v329, 0
    %448 = vmatpush.bf16.msra.mxu0 0
    %449 = vmatpush.bf16.msra.mxu0 0
    %450 = vmatpush.bf16.msra.mxu0 0
    %451 = vmatpush.bf16.msra.mxu0 0
    %452 = vmatpush.bf16.msra.mxu0 %v431
    %453 = vmatpush.bf16.msra.mxu0 %v430
    %454 = vmatpush.bf16.msra.mxu0 %v429
    %455 = vmatpush.bf16.msra.mxu0 %v428
    %456 = vmatmul.bf16.gmra.mxu0 %v437
    %v457 = vpop.f32.mrf.mxu0
    %v458 = vadd.f32 0.0, %v457
    %v459 = vpop.f32.mrf.mxu0
    %v460 = vadd.f32 0.0, %v459
    %461 = vmatmul.bf16.gmra.mxu0 %v440
    %v462 = vpop.f32.mrf.mxu0
    %v463 = vadd.f32 0.0, %v462
    %v464 = vpop.f32.mrf.mxu0
    %v465 = vadd.f32 0.0, %v464
    %466 = vmatmul.bf16.gmra.mxu0 %v443
    %v467 = vpop.f32.mrf.mxu0
    %v468 = vadd.f32 0.0, %v467
    %v469 = vpop.f32.mrf.mxu0
    %v470 = vadd.f32 0.0, %v469
    %471 = vmatmul.bf16.gmra.mxu0 %v446
    %v472 = vpop.f32.mrf.mxu0
    %v473 = vadd.f32 0.0, %v472
    %v474 = vpop.f32.mrf.mxu0
    %v475 = vadd.f32 0.0, %v474
    %476 = vdwg.mxu0
    %v485 = vunpack.c.l.b16 %v396
    %v486 = vunpack.c.l.b16 %v397
    %v487 = vunpack.c.l.b16 %v398
    %v488 = vunpack.c.l.b16 %v399
    %v489 = vunpack.c.l.b16 %v400
    %v490 = vunpack.c.l.b16 %v401
    %v491 = vunpack.c.l.b16 %v402
    %v492 = vunpack.c.l.b16 %v403
    %v493 = vpack.c.b16 %v486, %v485
    %v494 = vpack.c.b16 %v488, %v487
    %v495 = vpack.c.b16 %v490, %v489
    %v496 = vpack.c.b16 %v492, %v491
    %v502 = vsel %vm350, %v392, 0
    %v505 = vsel %vm350, %v393, 0
    %v508 = vsel %vm350, %v394, 0
    %v511 = vsel %vm350, %v395, 0
    %513 = vmatpush.bf16.msra.mxu0 0
    %514 = vmatpush.bf16.msra.mxu0 0
    %515 = vmatpush.bf16.msra.mxu0 0
    %516 = vmatpush.bf16.msra.mxu0 0
    %517 = vmatpush.bf16.msra.mxu0 %v496
    %518 = vmatpush.bf16.msra.mxu0 %v495
    %519 = vmatpush.bf16.msra.mxu0 %v494
    %520 = vmatpush.bf16.msra.mxu0 %v493
    %521 = vmatmul.bf16.gmra.mxu0 %v502
    %v522 = vpop.f32.mrf.mxu0
    %v523 = vadd.f32 %v458, %v522
    %v524 = vpop.f32.mrf.mxu0
    %v525 = vadd.f32 %v460, %v524
    %526 = vmatmul.bf16.gmra.mxu0 %v505
    %v527 = vpop.f32.mrf.mxu0
    %v528 = vadd.f32 %v463, %v527
    %v529 = vpop.f32.mrf.mxu0
    %v530 = vadd.f32 %v465, %v529
    %531 = vmatmul.bf16.gmra.mxu0 %v508
    %v532 = vpop.f32.mrf.mxu0
    %v533 = vadd.f32 %v468, %v532
    %v534 = vpop.f32.mrf.mxu0
    %v535 = vadd.f32 %v470, %v534
    %536 = vmatmul.bf16.gmra.mxu0 %v511
    %v537 = vpop.f32.mrf.mxu0
    %v538 = vadd.f32 %v473, %v537
    %v539 = vpop.f32.mrf.mxu0
    %v540 = vadd.f32 %v475, %v539
    %541 = vdwg.mxu0
    %v542 = vld [vmem:[#allocation2 + $0x1] sm:$0x1]
    %v543 = vperm.slane %v542, 0
    %v544 = vadd.f32 %v523, %v543
    %v545 = vadd.f32 %v525, %v543
    %v546 = vadd.f32 %v528, %v543
    %v547 = vadd.f32 %v530, %v543
    %v548 = vadd.f32 %v533, %v543
    %v549 = vadd.f32 %v535, %v543
    %v550 = vadd.f32 %v538, %v543
    %v551 = vadd.f32 %v540, %v543
    %v552 = vmax.f32 %v544, 0.0
    %v553 = vmax.f32 %v545, 0.0
    %v554 = vmax.f32 %v546, 0.0
    %v555 = vmax.f32 %v547, 0.0
    %v556 = vmax.f32 %v548, 0.0
    %v557 = vmax.f32 %v549, 0.0
    %v558 = vmax.f32 %v550, 0.0
    %v559 = vmax.f32 %v551, 0.0
    %v560 = vpack.c.bf16 %v553, %v552
    %v561 = vpack.c.bf16 %v555, %v554
    %v562 = vpack.c.bf16 %v557, %v556
    %v563 = vpack.c.bf16 %v559, %v558
    %564 = vmatpush.bf16.msra.mxu0 0
    %565 = vmatpush.bf16.msra.mxu0 0
    %566 = vmatpush.bf16.msra.mxu0 0
    %567 = vmatpush.bf16.msra.mxu0 0
    %568 = vmatpush.bf16.msra.mxu0 %v563
    %569 = vmatpush.bf16.msra.mxu0 %v562
    %570 = vmatpush.bf16.msra.mxu0 %v561
    %571 = vmatpush.bf16.msra.mxu0 %v560
    %572 = vmatmul.bf16.gmra.mxu0 %v352
    %v573 = vpop.f32.mrf.mxu0
    %v574 = vadd.f32 0.0, %v573
    %v575 = vpop.f32.mrf.mxu0
    %v576 = vadd.f32 0.0, %v575
    %577 = vmatmul.bf16.gmra.mxu0 %v355
    %v578 = vpop.f32.mrf.mxu0
    %v579 = vadd.f32 0.0, %v578
    %v580 = vpop.f32.mrf.mxu0
    %v581 = vadd.f32 0.0, %v580
    %582 = vmatmul.bf16.gmra.mxu0 %v358
    %v583 = vpop.f32.mrf.mxu0
    %v584 = vadd.f32 0.0, %v583
    %v585 = vpop.f32.mrf.mxu0
    %v586 = vadd.f32 0.0, %v585
    %587 = vmatmul.bf16.gmra.mxu0 %v361
    %v588 = vpop.f32.mrf.mxu0
    %v589 = vadd.f32 0.0, %v588
    %v590 = vpop.f32.mrf.mxu0
    %v591 = vadd.f32 0.0, %v590
    %592 = vdwg.mxu0
    %v593 = vpack.c.bf16 %v576, %v574
    %v594 = vpack.c.bf16 %v581, %v579
    %v595 = vpack.c.bf16 %v586, %v584
    %v596 = vpack.c.bf16 %v591, %v589
    %v597 = vld [vmem:[%s4 + $0x88] sm:$0xf]
    %v598 = vld [vmem:[%s4 + $0x8c] sm:$0xf]
    %v599 = vld [vmem:[%s4 + $0x90] sm:$0xf]
    %v600 = vld [vmem:[%s4 + $0x94] sm:$0xf]
    %v603 = vunpack.c.l.b16 %v599
    %v604 = vunpack.c.l.b16 %v600
    %v605 = vpack.c.b16 %v604, %v603
    %vm607 = vcmask 130048
    %v609 = vsel %vm607, %v560, 0
    %v612 = vsel %vm607, %v561, 0
    %v615 = vsel %vm607, %v562, 0
    %v618 = vsel %vm607, %v563, 0
    %620 = vmatpush.bf16.msra.mxu0 0
    %621 = vmatpush.bf16.msra.mxu0 0
    %622 = vmatpush.bf16.msra.mxu0 0
    %623 = vmatpush.bf16.msra.mxu0 0
    %624 = vmatpush.bf16.msra.mxu0 0
    %625 = vmatpush.bf16.msra.mxu0 0
    %626 = vmatpush.bf16.msra.mxu0 0
    %627 = vmatpush.bf16.msra.mxu0 %v605
    %628 = vmatmul.bf16.gmra.mxu0 %v609
    %v629 = vpop.f32.mrf.mxu0
    %v630 = vadd.f32 0.0, %v629
    %v631 = vpop.f32.mrf.mxu0
    %v632 = vadd.f32 0.0, %v631
    %633 = vmatmul.bf16.gmra.mxu0 %v612
    %v634 = vpop.f32.mrf.mxu0
    %v635 = vadd.f32 0.0, %v634
    %v636 = vpop.f32.mrf.mxu0
    %v637 = vadd.f32 0.0, %v636
    %638 = vmatmul.bf16.gmra.mxu0 %v615
    %v639 = vpop.f32.mrf.mxu0
    %v640 = vadd.f32 0.0, %v639
    %v641 = vpop.f32.mrf.mxu0
    %v642 = vadd.f32 0.0, %v641
    %643 = vmatmul.bf16.gmra.mxu0 %v618
    %v644 = vpop.f32.mrf.mxu0
    %v645 = vadd.f32 0.0, %v644
    %v646 = vpop.f32.mrf.mxu0
    %v647 = vadd.f32 0.0, %v646
    %648 = vdwg.mxu0
    %v651 = vunpack.c.l.b16 %v597
    %v652 = vunpack.c.l.b16 %v598
    %v653 = vpack.c.b16 %v652, %v651
    %v656 = vsel %vm607, %v593, 0
    %v659 = vsel %vm607, %v594, 0
    %v662 = vsel %vm607, %v595, 0
    %v665 = vsel %vm607, %v596, 0
    %667 = vmatpush.bf16.msra.mxu0 0
    %668 = vmatpush.bf16.msra.mxu0 0
    %669 = vmatpush.bf16.msra.mxu0 0
    %670 = vmatpush.bf16.msra.mxu0 0
    %671 = vmatpush.bf16.msra.mxu0 0
    %672 = vmatpush.bf16.msra.mxu0 0
    %673 = vmatpush.bf16.msra.mxu0 0
    %674 = vmatpush.bf16.msra.mxu0 %v653
    %675 = vmatmul.bf16.gmra.mxu0 %v656
    %v676 = vpop.f32.mrf.mxu0
    %v677 = vadd.f32 %v630, %v676
    %v678 = vpop.f32.mrf.mxu0
    %v679 = vadd.f32 %v632, %v678
    %680 = vmatmul.bf16.gmra.mxu0 %v659
    %v681 = vpop.f32.mrf.mxu0
    %v682 = vadd.f32 %v635, %v681
    %v683 = vpop.f32.mrf.mxu0
    %v684 = vadd.f32 %v637, %v683
    %685 = vmatmul.bf16.gmra.mxu0 %v662
    %v686 = vpop.f32.mrf.mxu0
    %v687 = vadd.f32 %v640, %v686
    %v688 = vpop.f32.mrf.mxu0
    %v689 = vadd.f32 %v642, %v688
    %690 = vmatmul.bf16.gmra.mxu0 %v665
    %v691 = vpop.f32.mrf.mxu0
    %v692 = vadd.f32 %v645, %v691
    %v693 = vpop.f32.mrf.mxu0
    %v694 = vadd.f32 %v647, %v693
    %695 = vdwg.mxu0
    %v696 = vld [vmem:[#allocation2 + $0x2] sm:$0x1]
    %v697 = vperm.slane %v696, 0
    %v698 = vadd.f32 %v677, %v697
    %v699 = vadd.f32 %v679, %v697
    %v700 = vadd.f32 %v682, %v697
    %v701 = vadd.f32 %v684, %v697
    %v702 = vadd.f32 %v687, %v697
    %v703 = vadd.f32 %v689, %v697
    %v704 = vadd.f32 %v692, %v697
    %v705 = vadd.f32 %v694, %v697
    %v706 = vmax.f32 %v698, 0.0
    %v707 = vmax.f32 %v699, 0.0
    %v708 = vmax.f32 %v700, 0.0
    %v709 = vmax.f32 %v701, 0.0
    %v710 = vmax.f32 %v702, 0.0
    %v711 = vmax.f32 %v703, 0.0
    %v712 = vmax.f32 %v704, 0.0
    %v713 = vmax.f32 %v705, 0.0
    %v714 = vpack.c.bf16 %v707, %v706
    %v715 = vpack.c.bf16 %v709, %v708
    %v716 = vpack.c.bf16 %v711, %v710
    %v717 = vpack.c.bf16 %v713, %v712
    %v718 = vld [vmem:[%s4 + $0x98] sm:$0xf]
    %v719 = vld [vmem:[%s4 + $0x9c] sm:$0xf]
    %v720 = vld [vmem:[%s4 + $0xa0] sm:$0xf]
    %v721 = vld [vmem:[%s4 + $0xa4] sm:$0xf]
    %v722 = vld [vmem:[#allocation2 + $0x3] sm:$0x1]
    %v723 = vperm.slane %v722, 0
    %v728 = vunpack.c.l.b16 %v718
    %v729 = vunpack.c.l.b16 %v719
    %v730 = vunpack.c.l.b16 %v720
    %v731 = vunpack.c.l.b16 %v721
    %v732 = vpack.c.b16 %v729, %v728
    %v733 = vpack.c.b16 %v731, %v730
    %vm736 = vcmask 261120
    %v738 = vsel %vm736, %v714, 0
    %v741 = vsel %vm736, %v715, 0
    %v744 = vsel %vm736, %v716, 0
    %v747 = vsel %vm736, %v717, 0
    %749 = vmatpush.bf16.msra.mxu0 0
    %750 = vmatpush.bf16.msra.mxu0 0
    %751 = vmatpush.bf16.msra.mxu0 0
    %752 = vmatpush.bf16.msra.mxu0 0
    %753 = vmatpush.bf16.msra.mxu0 0
    %754 = vmatpush.bf16.msra.mxu0 0
    %755 = vmatpush.bf16.msra.mxu0 %v733
    %756 = vmatpush.bf16.msra.mxu0 %v732
    %757 = vmatmul.bf16.gmra.mxu0 %v738
    %v758 = vpop.f32.mrf.mxu0
    %v759 = vadd.f32 %v723, %v758
    %v760 = vpop.f32.mrf.mxu0
    %v761 = vadd.f32 %v723, %v760
    %762 = vmatmul.bf16.gmra.mxu0 %v741
    %v763 = vpop.f32.mrf.mxu0
    %v764 = vadd.f32 %v723, %v763
    %v765 = vpop.f32.mrf.mxu0
    %v766 = vadd.f32 %v723, %v765
    %767 = vmatmul.bf16.gmra.mxu0 %v744
    %v768 = vpop.f32.mrf.mxu0
    %v769 = vadd.f32 %v723, %v768
    %v770 = vpop.f32.mrf.mxu0
    %v771 = vadd.f32 %v723, %v770
    %772 = vmatmul.bf16.gmra.mxu0 %v747
    %v773 = vpop.f32.mrf.mxu0
    %v774 = vadd.f32 %v723, %v773
    %v775 = vpop.f32.mrf.mxu0
    %v776 = vadd.f32 %v723, %v775
    %777 = vdwg.mxu0
    %778 = vst [vmem:[%s6] sm:$0xff] %v759
    %779 = vst [vmem:[%s6 + $0x8] sm:$0xff] %v761
    %780 = vst [vmem:[%s6 + $0x10] sm:$0xff] %v764
    %781 = vst [vmem:[%s6 + $0x18] sm:$0xff] %v766
    %782 = vst [vmem:[%s6 + $0x20] sm:$0xff] %v769
    %783 = vst [vmem:[%s6 + $0x28] sm:$0xff] %v771
    %784 = vst [vmem:[%s6 + $0x30] sm:$0xff] %v774
    %785 = vst [vmem:[%s6 + $0x38] sm:$0xff] %v776
    // Predicated region
    $region30: #{gcn_forward.1} parent=1 // pred_check
      _
    $region31: #{gcn_forward.1} parent=1 // pred_check_branch
      %787 = sbr.rel (0) target = $region33
    $region32: #{gcn_forward.1} parent=1 // pred_region
      _
    $region33: #{gcn_forward.1} parent=1 // pred_fallthru
      _
    // Predicated region
    $region34: #{gcn_forward.1} parent=1 // pred_check
      _
    $region35: #{gcn_forward.1} parent=1 // pred_check_branch
      %789 = sbr.rel (0) target = $region37
    $region36: #{gcn_forward.1} parent=1 // pred_region
      _
    $region37: #{gcn_forward.1} parent=1 // pred_fallthru
      _
    %790 = vsyncpa [#allocation3], 1

</llo_original>
